<compile_context>
chip_gen: v5e
topology: v5e:2x2
jax: 0.10.0
libtpu: 0.0.40
codegen_flags: <defaults>
</compile_context>

<pallas_src>
import math

import jax
import jax.numpy as jnp
from jax.experimental import pallas as pl
from jax.experimental.pallas import tpu as pltpu

# --- module hyper-parameters (HardConcrete.__init__ defaults) ---------------
BETA = 1.0 / 3.0                 # temp (fix_temp=True -> plain float)
GAMMA = -0.2
ZETA = 1.0
GAMMA_ZETA_RATIO = math.log(-GAMMA / ZETA)
LOC_BIAS = 3.0
# clip(sigmoid(z)*(ZETA-GAMMA)+GAMMA, 0, 1) > 0.5   <=>   z > log((0.5-GAMMA)/(ZETA-0.5))
THRESH_LOGIT = math.log((0.5 - GAMMA) / (ZETA - 0.5))


def _hc_train_kernel(x_ref, u_ref, gate_ref, pen_ref):
    """Training path: hard gate + per-tile penalty partial sum."""
    x = x_ref[...].astype(jnp.float32) + LOC_BIAS
    u = u_ref[...].astype(jnp.float32)
    noise_logit = jnp.log(u) - jnp.log1p(-u)      # log1p for u -> 1 stability

    # hard 0/1 gate == forward value of the straight-through estimator;
    # sigmoid is monotone, so threshold directly in logit space.
    gate_ref[...] = ((noise_logit + x) > (BETA * THRESH_LOGIT)).astype(gate_ref.dtype)

    penalty = jax.nn.sigmoid(x - BETA * GAMMA_ZETA_RATIO)
    # lane-dense (1,1,8,128) partial-sum block; reduced & divided in wrapper.
    pen_ref[...] = jnp.broadcast_to(jnp.sum(penalty), pen_ref.shape).astype(jnp.float32)


def _hc_eval_kernel(x_ref, gate_ref):
    """Eval path: single compare per element, no u DMA, no penalty work."""
    x = x_ref[...].astype(jnp.float32) + LOC_BIAS
    gate_ref[...] = (x > THRESH_LOGIT).astype(gate_ref.dtype)


def _pick_tiles(M, N, target_block_bytes):
    """Pick (tile_m, tile_n) giving ~target-sized, (8,128)-legal blocks."""
    bpe = 4  # budget per element in f32 bytes (worst case among x/u/gate blocks)
    # Tile N only when it is 128-divisible AND even an 8-row block blows the budget.
    if N % 128 == 0 and 8 * N * bpe > target_block_bytes:
        tile_n = max(128, min(N, (target_block_bytes // (8 * bpe)) // 128 * 128))
        while N % tile_n:
            tile_n -= 128
    else:
        tile_n = N                       # full-extent block on lanes: always legal
    if M % 8 != 0:
        tile_m = M                       # full-extent block on rows: always legal
    else:
        tile_m = max(8, min(M, (target_block_bytes // (bpe * tile_n)) // 8 * 8))
        while M % tile_m:
            tile_m -= 8
    return tile_m, tile_n


def hard_concrete(x, u=None, *, training=False, gate_dtype=jnp.float32,
                  target_block_bytes=2 << 20):
    """Pallas wrapper. Returns (hard_gate, penalty_mean), matching the forward
    value of HardConcrete.forward(..., summarize_penalty=True)."""
    assert x.ndim == 2, "kernel expects [M, N]; reshape in the caller"
    M, N = x.shape
    tile_m, tile_n = _pick_tiles(M, N, target_block_bytes)
    grid = (M // tile_m, N // tile_n)
    tile_spec = pl.BlockSpec((tile_m, tile_n), lambda i, j: (i, j))
    cparams = pltpu.CompilerParams(dimension_semantics=("parallel", "parallel"))

    if not training:
        gate = pl.pallas_call(
            _hc_eval_kernel,
            out_shape=jax.ShapeDtypeStruct((M, N), gate_dtype),
            grid_spec=pltpu.PrefetchScalarGridSpec(
                num_scalar_prefetch=0,
                grid=grid,
                in_specs=[tile_spec],
                out_specs=tile_spec,
            ),
            compiler_params=cparams,
        )(x)
        return gate, jnp.zeros((), jnp.float32)

    assert u is not None and u.shape == x.shape, "training path needs uniform noise u"
    gate, pen_partials = pl.pallas_call(
        _hc_train_kernel,
        out_shape=(
            jax.ShapeDtypeStruct((M, N), gate_dtype),
            jax.ShapeDtypeStruct((grid[0], grid[1], 8, 128), jnp.float32),
        ),
        grid_spec=pltpu.PrefetchScalarGridSpec(
            num_scalar_prefetch=0,
            grid=grid,
            in_specs=[tile_spec, tile_spec],
            out_specs=[
                tile_spec,
                pl.BlockSpec((1, 1, 8, 128), lambda i, j: (i, j, 0, 0)),
            ],
        ),
        compiler_params=cparams,
    )(x, u)
    # scale once at the end (better rounding than per-tile inv_count scaling)
    pen_mean = pen_partials[:, :, 0, 0].sum() / jnp.float32(M * N)
    return gate, pen_mean


def _reference(x, u, training):
    """Pure-JAX reference mirroring the PyTorch forward."""
    x = x + LOC_BIAS
    if training:
        s = jax.nn.sigmoid((jnp.log(u) - jnp.log(1.0 - u) + x) / BETA)
        penalty = jax.nn.sigmoid(x - BETA * GAMMA_ZETA_RATIO)
    else:
        s = jax.nn.sigmoid(x)
        penalty = jnp.zeros_like(x)
    pen_mean = penalty.mean()
    s = s * (ZETA - GAMMA) + GAMMA
    clipped = jnp.clip(s, 0.0, 1.0)
    hard = (clipped > 0.5).astype(jnp.float32)   # forward value of the STE
    return hard, pen_mean


if __name__ == "__main__":
    key = jax.random.PRNGKey(0)
    kx, ku = jax.random.split(key)

    M, N = 64, 256  # e.g. 64 graph edges x 256 gate logits (any 2-D gate tensor)
    x = jax.random.normal(kx, (M, N), dtype=jnp.float32)
    u = jax.random.uniform(ku, (M, N), dtype=jnp.float32,
                           minval=1e-6, maxval=1.0 - 1e-6)

    # eval path (self.training == False): no u buffer, penalty == 0
    gate_e, pen_e = hard_concrete(x, training=False)
    jax.block_until_ready((gate_e, pen_e))
    ref_gate_e, ref_pen_e = _reference(x, u, training=False)
    assert jnp.array_equal(gate_e, ref_gate_e)
    assert jnp.allclose(pen_e, ref_pen_e, atol=1e-6)

    # training path (self.training == True), single-tile grid
    gate_t, pen_t = hard_concrete(x, u, training=True)
    jax.block_until_ready((gate_t, pen_t))
    ref_gate_t, ref_pen_t = _reference(x, u, training=True)
    assert jnp.array_equal(gate_t, ref_gate_t)
    assert jnp.allclose(pen_t, ref_pen_t, atol=1e-5, rtol=1e-5)

    # training path again with a tiny block budget to force a multi-tile
    # (8 x 2) grid and exercise the per-tile penalty partial reduction.
    gate_s, pen_s = hard_concrete(x, u, training=True, target_block_bytes=4096)
    jax.block_until_ready((gate_s, pen_s))
    assert jnp.array_equal(gate_s, ref_gate_t)
    assert jnp.allclose(pen_s, ref_pen_t, atol=1e-5, rtol=1e-5)

    print("KERNEL_OK")
</pallas_src>

<mosaic_0001>
module attributes {stable_mosaic.version = 11 : i64} {
  func.func @_hc_eval_kernel(%arg0: i32, %arg1: i32, %arg2: memref<64x256xf32, #tpu.memory_space<vmem>>, %arg3: memref<64x256xf32, #tpu.memory_space<vmem>>) attributes {dimension_semantics = [#tpu.dimension_semantics<parallel>, #tpu.dimension_semantics<parallel>], iteration_bounds = array<i64: 1, 1>, scalar_prefetch = 0 : i64, scratch_operands = 0 : i64, tpu.core_type = #tpu.core_type<tc>, window_params = [{transform_indices = @transform_0, window_bounds = array<i64: 64, 256>}, {transform_indices = @transform_1, window_bounds = array<i64: 64, 256>}]} {
    %c0 = arith.constant 0 : index
    %c0_0 = arith.constant 0 : index
    %0 = vector.load %arg2[%c0, %c0_0] : memref<64x256xf32, #tpu.memory_space<vmem>>, vector<64x256xf32>
    %cst = arith.constant 3.000000e+00 : f32
    %1 = vector.broadcast %cst : f32 to vector<64x256xf32>
    %2 = arith.addf %0, %1 : vector<64x256xf32>
    %cst_1 = arith.constant 0.336472243 : f32
    %3 = vector.broadcast %cst_1 : f32 to vector<64x256xf32>
    %4 = arith.cmpf ogt, %2, %3 : vector<64x256xf32>
    %5 = arith.extui %4 : vector<64x256xi1> to vector<64x256xi32>
    %6 = arith.sitofp %5 : vector<64x256xi32> to vector<64x256xf32>
    %c0_2 = arith.constant 0 : index
    %c0_3 = arith.constant 0 : index
    %7 = vector.load %arg3[%c0_2, %c0_3] : memref<64x256xf32, #tpu.memory_space<vmem>>, vector<64x256xf32>
    tpu.vector_store %arg3[%c0_2, %c0_3], %6 {strides = array<i32>} : memref<64x256xf32, #tpu.memory_space<vmem>>, vector<64x256xf32>,
    return
  }
  func.func @transform_0(%arg0: i32, %arg1: i32) -> (i32, i32) {
    %c0_i32 = arith.constant 0 : i32
    return %arg0, %arg1 : i32, i32
  }
  func.func @transform_1(%arg0: i32, %arg1: i32) -> (i32, i32) {
    %c0_i32 = arith.constant 0 : i32
    return %arg0, %arg1 : i32, i32
  }
}

</mosaic_0001>

<llo_original>
// kernel: tpu_custom_call.1
$region0: #{tpu_custom_call.1}
  #allocation0 [shape = 'u32[]', space=smem, size = 0x4, offset = 0x4, fixed_abs, tag = 'smem constant byte address 0x4 - core index']
  #allocation1 [shape = 'u32[72,128]{1,0:T(1,128)}', space=vmem, size = 0x9000, scoped, tag = 'internal scratch']
  %s0 = inlined_call_operand.hbm [shape: f32[64,256], index: 0, kind: input, shape index: {}]
  %s1 = inlined_call_operand.hbm [shape: f32[64,256], index: 1, kind: output, shape index: {}]
  %s2 = sld [smem:[#allocation0]]
  $region18: #{tpu_custom_call.1} parent=0
    _
  %s4 = ssub.s32 1, %s2
  %s5 = scalar_select 0, %s4, %s2
  $region1: #{tpu_custom_call.1} parent=0
    #allocation2 [shape = 'u8[65536]{0}', space=vmem, size = 0x10000, scoped, tag = 'input window, operand 0, single buffered']
    #allocation3 [shape = 's32[1]{0}', space=sflag, size = 0x4, scoped, tag = 'scoped memory for tpu_custom_call.1']
    #allocation4 [shape = 's32[1]{0}', space=sflag, size = 0x4, scoped, tag = 'scoped memory for tpu_custom_call.1']
    #allocation5 [shape = 'u8[65536]{0}', space=vmem, size = 0x10000, scoped, tag = 'output window, operand 0, single buffered']
    %6 = vsyncpa [#allocation3], 0
    %7 = vsyncpa [#allocation4], 0
    // Predicated region
    $region2: #{tpu_custom_call.1} parent=1 // pred_check
      _
    $region3: #{tpu_custom_call.1} parent=1 // pred_check_branch
      %9 = sbr.rel (0) target = $region5
    $region4: #{tpu_custom_call.1} parent=1 // pred_region
      %11 = vsyncadd [#allocation3], 0
      %s12 = sshll.u32 %s0, 4
      %s13 = int_to_ptr.hbm [resolvable:$true] %s12
      %s14 = sshll.u32 [#allocation2], 4
      %s15 = int_to_ptr.vmem [resolvable:$true] %s14
      %20 = dma.hbm_to_vmem [thread:$0]  %s13, 2048, %s15, [#allocation3], 256, 256, 16
    $region5: #{tpu_custom_call.1} parent=1 // pred_fallthru
      _
    // Predicated region
    $region6: #{tpu_custom_call.1} parent=1 // pred_check
      _
    $region7: #{tpu_custom_call.1} parent=1 // pred_check_branch
      %22 = sbr.rel (0) target = $region9
    $region8: #{tpu_custom_call.1} parent=1 // pred_region
      %24 = dma.done [#allocation3], 2048
    $region9: #{tpu_custom_call.1} parent=1 // pred_fallthru
      _
    %v25 = vld [vmem:[#allocation2] sm:$0xff]
    %v26 = vld [vmem:[#allocation2 + $0x8] sm:$0xff]
    %v27 = vld [vmem:[#allocation2 + $0x10] sm:$0xff]
    %v28 = vld [vmem:[#allocation2 + $0x18] sm:$0xff]
    %v29 = vld [vmem:[#allocation2 + $0x20] sm:$0xff]
    %v30 = vld [vmem:[#allocation2 + $0x28] sm:$0xff]
    %v31 = vld [vmem:[#allocation2 + $0x30] sm:$0xff]
    %v32 = vld [vmem:[#allocation2 + $0x38] sm:$0xff]
    %v33 = vld [vmem:[#allocation2 + $0x40] sm:$0xff]
    %v34 = vld [vmem:[#allocation2 + $0x48] sm:$0xff]
    %v35 = vld [vmem:[#allocation2 + $0x50] sm:$0xff]
    %v36 = vld [vmem:[#allocation2 + $0x58] sm:$0xff]
    %v37 = vld [vmem:[#allocation2 + $0x60] sm:$0xff]
    %v38 = vld [vmem:[#allocation2 + $0x68] sm:$0xff]
    %v39 = vld [vmem:[#allocation2 + $0x70] sm:$0xff]
    %v40 = vld [vmem:[#allocation2 + $0x78] sm:$0xff]
    %v41 = vadd.f32 %v25, 3.0
    %v42 = vadd.f32 %v26, 3.0
    %v43 = vadd.f32 %v27, 3.0
    %v44 = vadd.f32 %v28, 3.0
    %v45 = vadd.f32 %v29, 3.0
    %v46 = vadd.f32 %v30, 3.0
    %v47 = vadd.f32 %v31, 3.0
    %v48 = vadd.f32 %v32, 3.0
    %v49 = vadd.f32 %v33, 3.0
    %v50 = vadd.f32 %v34, 3.0
    %v51 = vadd.f32 %v35, 3.0
    %v52 = vadd.f32 %v36, 3.0
    %v53 = vadd.f32 %v37, 3.0
    %v54 = vadd.f32 %v38, 3.0
    %v55 = vadd.f32 %v39, 3.0
    %v56 = vadd.f32 %v40, 3.0
    %vm57 = vcmp.gt.f32.partialorder %v41, 0.33647224
    %vm58 = vcmp.gt.f32.partialorder %v42, 0.33647224
    %vm59 = vcmp.gt.f32.partialorder %v43, 0.33647224
    %vm60 = vcmp.gt.f32.partialorder %v44, 0.33647224
    %vm61 = vcmp.gt.f32.partialorder %v45, 0.33647224
    %vm62 = vcmp.gt.f32.partialorder %v46, 0.33647224
    %vm63 = vcmp.gt.f32.partialorder %v47, 0.33647224
    %vm64 = vcmp.gt.f32.partialorder %v48, 0.33647224
    %vm65 = vcmp.gt.f32.partialorder %v49, 0.33647224
    %vm66 = vcmp.gt.f32.partialorder %v50, 0.33647224
    %vm67 = vcmp.gt.f32.partialorder %v51, 0.33647224
    %vm68 = vcmp.gt.f32.partialorder %v52, 0.33647224
    %vm69 = vcmp.gt.f32.partialorder %v53, 0.33647224
    %vm70 = vcmp.gt.f32.partialorder %v54, 0.33647224
    %vm71 = vcmp.gt.f32.partialorder %v55, 0.33647224
    %vm72 = vcmp.gt.f32.partialorder %v56, 0.33647224
    %v73 = vsel %vm57, 1, 0
    %v74 = vsel %vm58, 1, 0
    %v75 = vsel %vm59, 1, 0
    %v76 = vsel %vm60, 1, 0
    %v77 = vsel %vm61, 1, 0
    %v78 = vsel %vm62, 1, 0
    %v79 = vsel %vm63, 1, 0
    %v80 = vsel %vm64, 1, 0
    %v81 = vsel %vm65, 1, 0
    %v82 = vsel %vm66, 1, 0
    %v83 = vsel %vm67, 1, 0
    %v84 = vsel %vm68, 1, 0
    %v85 = vsel %vm69, 1, 0
    %v86 = vsel %vm70, 1, 0
    %v87 = vsel %vm71, 1, 0
    %v88 = vsel %vm72, 1, 0
    %v89 = vcvt.s32.f32 %v73
    %v90 = vcvt.s32.f32 %v74
    %v91 = vcvt.s32.f32 %v75
    %v92 = vcvt.s32.f32 %v76
    %v93 = vcvt.s32.f32 %v77
    %v94 = vcvt.s32.f32 %v78
    %v95 = vcvt.s32.f32 %v79
    %v96 = vcvt.s32.f32 %v80
    %v97 = vcvt.s32.f32 %v81
    %v98 = vcvt.s32.f32 %v82
    %v99 = vcvt.s32.f32 %v83
    %v100 = vcvt.s32.f32 %v84
    %v101 = vcvt.s32.f32 %v85
    %v102 = vcvt.s32.f32 %v86
    %v103 = vcvt.s32.f32 %v87
    %v104 = vcvt.s32.f32 %v88
    %105 = vst [vmem:[#allocation5] sm:$0xff] %v89
    %106 = vst [vmem:[#allocation5 + $0x8] sm:$0xff] %v90
    %107 = vst [vmem:[#allocation5 + $0x10] sm:$0xff] %v91
    %108 = vst [vmem:[#allocation5 + $0x18] sm:$0xff] %v92
    %109 = vst [vmem:[#allocation5 + $0x20] sm:$0xff] %v93
    %110 = vst [vmem:[#allocation5 + $0x28] sm:$0xff] %v94
    %111 = vst [vmem:[#allocation5 + $0x30] sm:$0xff] %v95
    %112 = vst [vmem:[#allocation5 + $0x38] sm:$0xff] %v96
    %113 = vst [vmem:[#allocation5 + $0x40] sm:$0xff] %v97
    %114 = vst [vmem:[#allocation5 + $0x48] sm:$0xff] %v98
    %115 = vst [vmem:[#allocation5 + $0x50] sm:$0xff] %v99
    %116 = vst [vmem:[#allocation5 + $0x58] sm:$0xff] %v100
    %117 = vst [vmem:[#allocation5 + $0x60] sm:$0xff] %v101
    %118 = vst [vmem:[#allocation5 + $0x68] sm:$0xff] %v102
    %119 = vst [vmem:[#allocation5 + $0x70] sm:$0xff] %v103
    %120 = vst [vmem:[#allocation5 + $0x78] sm:$0xff] %v104
    // Predicated region
    $region10: #{tpu_custom_call.1} parent=1 // pred_check
      _
    $region11: #{tpu_custom_call.1} parent=1 // pred_check_branch
      %122 = sbr.rel (0) target = $region13
    $region12: #{tpu_custom_call.1} parent=1 // pred_region
      %124 = vsyncadd [#allocation4], 0
      %s125 = sshll.u32 [#allocation5], 4
      %s126 = int_to_ptr.vmem [resolvable:$true] %s125
      %s127 = sshll.u32 %s1, 4
      %s128 = int_to_ptr.hbm [resolvable:$true] %s127
      %133 = dma.vmem_to_hbm [thread:$0]  %s126, 2048, %s128, [#allocation4], 256, 256, 16
    $region13: #{tpu_custom_call.1} parent=1 // pred_fallthru
      _
    // Predicated region
    $region14: #{tpu_custom_call.1} parent=1 // pred_check
      _
    $region15: #{tpu_custom_call.1} parent=1 // pred_check_branch
      %135 = sbr.rel (0) target = $region17
    $region16: #{tpu_custom_call.1} parent=1 // pred_region
      %137 = dma.done [#allocation4], 2048
    $region17: #{tpu_custom_call.1} parent=1 // pred_fallthru
      _
    %138 = vsyncpa [#allocation3], 1
    %139 = vsyncpa [#allocation4], 1

</llo_original>
